<compile_context>
chip_gen: v7x
topology: tpu7x:2x2x1
jax: 0.10.0
libtpu: 0.0.40
codegen_flags: <defaults>
</compile_context>

<pallas_src>
import functools

import jax
import jax.numpy as jnp
from jax import lax
from jax.experimental import pallas as pl
from jax.experimental.pallas import tpu as pltpu

EMA_CHUNK = 8      # rows per register-carried EMA chunk (one f32 sublane group)
KEY_CHUNK = 256    # key-block size for online-softmax attention (clamped to S)


def mega_block_kernel(x_ref, params_ref, w_ref, out_ref, ema_ref, *, d_real):
    # x_ref:      [1, S, Dp]  one batch element (feature dim zero-padded to Dp)
    # params_ref: [4, Dp]     rows: alpha, gamma, beta, bias (zero-padded)
    # w_ref:      [Dp, Dp]    Linear weight, [in, out] layout, bf16, zero-padded
    # out_ref:    [1, S, Dp]
    # ema_ref:    [S, Dp]     VMEM scratch holding the EMA sequence (Q == K)
    S = x_ref.shape[1]
    Dp = x_ref.shape[2]

    alpha = params_ref[0:1, :]           # [1, Dp]
    gamma = params_ref[1:2, :]
    beta = params_ref[2:3, :]
    bias = params_ref[3:4, :]
    one_m_alpha = 1.0 - alpha

    # --- EMA along sequence: h_t = a*x_t + (1-a)*h_{t-1}, h_{-1} = 0 ---------
    # Register-carried, chunked recurrence; one unmasked [EMA_CHUNK, Dp] store
    # per chunk, no VMEM round-trip for the recurrent state.
    h = jnp.zeros((1, Dp), jnp.float32)
    for c in range(S // EMA_CHUNK):                       # static trip count
        start = c * EMA_CHUNK
        x_c = x_ref[0, start:start + EMA_CHUNK, :].astype(jnp.float32)
        rows = []
        for i in range(EMA_CHUNK):                        # fully unrolled
            h = alpha * x_c[i:i + 1, :] + one_m_alpha * h
            rows.append(h)
        ema_ref[start:start + EMA_CHUNK, :] = jnp.concatenate(rows, axis=0)

    # --- single-head dot-product attention (Q = K = EMA(x), V = x) ----------
    # Key-blocked online softmax: footprint is O(S * KEY_CHUNK), never [S, S].
    tk = min(S, KEY_CHUNK)
    q = ema_ref[...].astype(jnp.bfloat16)                 # [S, Dp] MXU operand
    m_i = jnp.full((S, 1), -jnp.inf, jnp.float32)
    l_i = jnp.zeros((S, 1), jnp.float32)
    acc = jnp.zeros((S, Dp), jnp.float32)
    for kc in range(S // tk):                             # static trip count
        ks = kc * tk
        k_c = ema_ref[ks:ks + tk, :].astype(jnp.bfloat16)        # [tk, Dp]
        v_c = x_ref[0, ks:ks + tk, :].astype(jnp.bfloat16)       # [tk, Dp]
        s = lax.dot_general(q, k_c, (((1,), (1,)), ((), ())),
                            preferred_element_type=jnp.float32)  # [S, tk]
        m_new = jnp.maximum(m_i, jnp.max(s, axis=-1, keepdims=True))
        a = jnp.exp(m_i - m_new)
        p = jnp.exp(s - m_new)
        l_i = a * l_i + jnp.sum(p, axis=-1, keepdims=True)
        acc = a * acc + jnp.dot(p.astype(jnp.bfloat16), v_c,
                                preferred_element_type=jnp.float32)
        m_i = m_new
    o = acc * pl.reciprocal(l_i, approx=True)             # [S, Dp]

    # --- LayerNorm over the real feature dim ---------------------------------
    # Padded lanes of `o` are exactly zero, so lane-wide sums equal sums over
    # the real D channels; divide by the real D via a constant multiply.
    inv_d = 1.0 / float(d_real)
    mu = jnp.sum(o, axis=-1, keepdims=True) * inv_d
    var = jnp.sum(o * o, axis=-1, keepdims=True) * inv_d - mu * mu
    normed = (o - mu) * lax.rsqrt(var + 1e-5)
    normed = normed * gamma + beta                        # padded lanes -> 0

    # --- feed-forward Linear + residual --------------------------------------
    ff = jnp.dot(normed.astype(jnp.bfloat16), w_ref[...],
                 preferred_element_type=jnp.float32) + bias
    out_ref[0] = (ff + normed).astype(out_ref.dtype)


def mega_block(x, alpha, gamma, beta, w, b):
    """x: [B, S, D]; w: [out, in] (PyTorch Linear layout); returns [B, S, D]."""
    B, S, D = x.shape
    LANE = 128
    Dp = pl.cdiv(D, LANE) * LANE
    assert S % EMA_CHUNK == 0, "S must be a multiple of EMA_CHUNK"
    tk = min(S, KEY_CHUNK)
    assert S % tk == 0, "S must be a multiple of the key chunk"

    pad = Dp - D
    x_p = jnp.pad(x, ((0, 0), (0, 0), (0, pad)))

    def _pad_row(v):
        return jnp.pad(jnp.reshape(v, (1, D)).astype(jnp.float32),
                       ((0, 0), (0, pad)))

    # alpha / gamma / beta / bias folded into a single lane-dense block.
    params = jnp.concatenate(
        [_pad_row(alpha), _pad_row(gamma), _pad_row(beta), _pad_row(b)], axis=0)

    # Linear weight: transpose to [in, out], zero-pad, bf16 MXU operand.
    w_p = jnp.pad(jnp.transpose(w).astype(jnp.float32),
                  ((0, pad), (0, pad))).astype(jnp.bfloat16)

    kernel = functools.partial(mega_block_kernel, d_real=D)

    out_p = pl.pallas_call(
        kernel,
        out_shape=jax.ShapeDtypeStruct((B, S, Dp), x.dtype),
        grid_spec=pltpu.PrefetchScalarGridSpec(
            num_scalar_prefetch=0,
            grid=(B,),
            in_specs=[
                pl.BlockSpec((1, S, Dp), lambda bi: (bi, 0, 0)),   # x (padded)
                pl.BlockSpec((4, Dp), lambda bi: (0, 0)),          # params
                pl.BlockSpec((Dp, Dp), lambda bi: (0, 0)),         # weight bf16
            ],
            out_specs=pl.BlockSpec((1, S, Dp), lambda bi: (bi, 0, 0)),
            scratch_shapes=[pltpu.VMEM((S, Dp), jnp.float32)],     # ema seq
        ),
        compiler_params=pltpu.CompilerParams(
            # Batch axis parallel: grid shards across the two TCs on v7x;
            # serial (and free) on v5e/v6e.
            dimension_semantics=("parallel",)),
    )(x_p, params, w_p)
    return out_p[..., :D]


if __name__ == "__main__":
    B, S, D = 2, 8, 32   # input_shape = output_shape = 32 as in MegaBlock.__init__

    key = jax.random.PRNGKey(0)
    kx, kw = jax.random.split(key)

    x = jax.random.normal(kx, (B, S, D), dtype=jnp.float32)

    # Deterministic parameter init.
    alpha = ((jnp.arange(D, dtype=jnp.float32) + 1.0) / (D + 1.0)).reshape(1, D)
    gamma = jnp.ones((1, D), jnp.float32)
    beta = jnp.zeros((1, D), jnp.float32)
    w = jax.random.normal(kw, (D, D), dtype=jnp.float32) / jnp.sqrt(float(D))
    b = jnp.zeros((1, D), jnp.float32)

    y = mega_block(x, alpha, gamma, beta, w, b)
    jax.block_until_ready(y)
    assert y.shape == (B, S, D)
    print("KERNEL_OK")
</pallas_src>

<mosaic_0001>
module attributes {stable_mosaic.version = 11 : i64} {
  func.func @mega_block_kernel(%arg0: i32, %arg1: memref<1x8x128xf32, #tpu.memory_space<vmem>>, %arg2: memref<4x128xf32, #tpu.memory_space<vmem>>, %arg3: memref<128x128xbf16, #tpu.memory_space<vmem>>, %arg4: memref<1x8x128xf32, #tpu.memory_space<vmem>>, %arg5: memref<8x128xf32, #tpu.memory_space<vmem>>) attributes {dimension_semantics = [#tpu.dimension_semantics<parallel>], iteration_bounds = array<i64: 2>, scalar_prefetch = 0 : i64, scratch_operands = 1 : i64, tpu.core_type = #tpu.core_type<tc>, window_params = [{transform_indices = @transform_0, window_bounds = array<i64: 1, 8, 128>}, {pipeline_mode = #tpu.pipeline_mode<synchronous>, transform_indices = @transform_1, window_bounds = array<i64: 4, 128>}, {pipeline_mode = #tpu.pipeline_mode<synchronous>, transform_indices = @transform_2, window_bounds = array<i64: 128, 128>}, {transform_indices = @transform_3, window_bounds = array<i64: 1, 8, 128>}]} {
    %c0 = arith.constant 0 : index
    %c0_0 = arith.constant 0 : index
    %0 = vector.load %arg2[%c0, %c0_0] : memref<4x128xf32, #tpu.memory_space<vmem>>, vector<1x128xf32>
    %c1 = arith.constant 1 : index
    %c0_1 = arith.constant 0 : index
    %1 = vector.load %arg2[%c1, %c0_1] : memref<4x128xf32, #tpu.memory_space<vmem>>, vector<1x128xf32>
    %c2 = arith.constant 2 : index
    %c0_2 = arith.constant 0 : index
    %2 = vector.load %arg2[%c2, %c0_2] : memref<4x128xf32, #tpu.memory_space<vmem>>, vector<1x128xf32>
    %c3 = arith.constant 3 : index
    %c0_3 = arith.constant 0 : index
    %3 = vector.load %arg2[%c3, %c0_3] : memref<4x128xf32, #tpu.memory_space<vmem>>, vector<1x128xf32>
    %cst = arith.constant 1.000000e+00 : f32
    %4 = vector.broadcast %cst : f32 to vector<1x128xf32>
    %5 = arith.subf %4, %0 : vector<1x128xf32>
    %cst_4 = arith.constant 0.000000e+00 : f32
    %6 = vector.broadcast %cst_4 : f32 to vector<1x128xf32>
    %c0_5 = arith.constant 0 : index
    %c0_6 = arith.constant 0 : index
    %c0_7 = arith.constant 0 : index
    %7 = vector.load %arg1[%c0_5, %c0_6, %c0_7] : memref<1x8x128xf32, #tpu.memory_space<vmem>>, vector<1x8x128xf32>
    %8 = vector.shape_cast %7 : vector<1x8x128xf32> to vector<8x128xf32>
    %9 = vector.extract_strided_slice %8 {offsets = [0, 0], sizes = [1, 128], strides = [1, 1]} : vector<8x128xf32> to vector<1x128xf32>
    %10 = arith.mulf %0, %9 : vector<1x128xf32>
    %11 = arith.mulf %5, %6 : vector<1x128xf32>
    %12 = arith.addf %10, %11 : vector<1x128xf32>
    %13 = vector.extract_strided_slice %8 {offsets = [1, 0], sizes = [1, 128], strides = [1, 1]} : vector<8x128xf32> to vector<1x128xf32>
    %14 = arith.mulf %0, %13 : vector<1x128xf32>
    %15 = arith.mulf %5, %12 : vector<1x128xf32>
    %16 = arith.addf %14, %15 : vector<1x128xf32>
    %17 = vector.extract_strided_slice %8 {offsets = [2, 0], sizes = [1, 128], strides = [1, 1]} : vector<8x128xf32> to vector<1x128xf32>
    %18 = arith.mulf %0, %17 : vector<1x128xf32>
    %19 = arith.mulf %5, %16 : vector<1x128xf32>
    %20 = arith.addf %18, %19 : vector<1x128xf32>
    %21 = vector.extract_strided_slice %8 {offsets = [3, 0], sizes = [1, 128], strides = [1, 1]} : vector<8x128xf32> to vector<1x128xf32>
    %22 = arith.mulf %0, %21 : vector<1x128xf32>
    %23 = arith.mulf %5, %20 : vector<1x128xf32>
    %24 = arith.addf %22, %23 : vector<1x128xf32>
    %25 = vector.extract_strided_slice %8 {offsets = [4, 0], sizes = [1, 128], strides = [1, 1]} : vector<8x128xf32> to vector<1x128xf32>
    %26 = arith.mulf %0, %25 : vector<1x128xf32>
    %27 = arith.mulf %5, %24 : vector<1x128xf32>
    %28 = arith.addf %26, %27 : vector<1x128xf32>
    %29 = vector.extract_strided_slice %8 {offsets = [5, 0], sizes = [1, 128], strides = [1, 1]} : vector<8x128xf32> to vector<1x128xf32>
    %30 = arith.mulf %0, %29 : vector<1x128xf32>
    %31 = arith.mulf %5, %28 : vector<1x128xf32>
    %32 = arith.addf %30, %31 : vector<1x128xf32>
    %33 = vector.extract_strided_slice %8 {offsets = [6, 0], sizes = [1, 128], strides = [1, 1]} : vector<8x128xf32> to vector<1x128xf32>
    %34 = arith.mulf %0, %33 : vector<1x128xf32>
    %35 = arith.mulf %5, %32 : vector<1x128xf32>
    %36 = arith.addf %34, %35 : vector<1x128xf32>
    %37 = vector.extract_strided_slice %8 {offsets = [7, 0], sizes = [1, 128], strides = [1, 1]} : vector<8x128xf32> to vector<1x128xf32>
    %38 = arith.mulf %0, %37 : vector<1x128xf32>
    %39 = arith.mulf %5, %36 : vector<1x128xf32>
    %40 = arith.addf %38, %39 : vector<1x128xf32>
    %41 = tpu.concatenate %12, %16, %20, %24, %28, %32, %36, %40 in 0 : vector<1x128xf32>, vector<1x128xf32>, vector<1x128xf32>, vector<1x128xf32>, vector<1x128xf32>, vector<1x128xf32>, vector<1x128xf32>, vector<1x128xf32> -> vector<8x128xf32>
    %c0_8 = arith.constant 0 : index
    %c0_9 = arith.constant 0 : index
    %42 = vector.load %arg5[%c0_8, %c0_9] : memref<8x128xf32, #tpu.memory_space<vmem>>, vector<8x128xf32>
    tpu.vector_store %arg5[%c0_8, %c0_9], %41 {strides = array<i32>} : memref<8x128xf32, #tpu.memory_space<vmem>>, vector<8x128xf32>,
    %c0_10 = arith.constant 0 : index
    %c0_11 = arith.constant 0 : index
    %43 = vector.load %arg5[%c0_10, %c0_11] : memref<8x128xf32, #tpu.memory_space<vmem>>, vector<8x128xf32>
    %44 = arith.truncf %43 : vector<8x128xf32> to vector<8x128xbf16>
    %cst_12 = arith.constant 0xFF800000 : f32
    %45 = vector.broadcast %cst_12 : f32 to vector<8x1xf32>
    %cst_13 = arith.constant 0.000000e+00 : f32
    %46 = vector.broadcast %cst_13 : f32 to vector<8x1xf32>
    %cst_14 = arith.constant 0.000000e+00 : f32
    %47 = vector.broadcast %cst_14 : f32 to vector<8x128xf32>
    %c0_15 = arith.constant 0 : index
    %c0_16 = arith.constant 0 : index
    %48 = vector.load %arg5[%c0_15, %c0_16] : memref<8x128xf32, #tpu.memory_space<vmem>>, vector<8x128xf32>
    %49 = arith.truncf %48 : vector<8x128xf32> to vector<8x128xbf16>
    %c0_17 = arith.constant 0 : index
    %c0_18 = arith.constant 0 : index
    %c0_19 = arith.constant 0 : index
    %50 = vector.load %arg1[%c0_17, %c0_18, %c0_19] : memref<1x8x128xf32, #tpu.memory_space<vmem>>, vector<1x8x128xf32>
    %51 = vector.shape_cast %50 : vector<1x8x128xf32> to vector<8x128xf32>
    %52 = arith.truncf %51 : vector<8x128xf32> to vector<8x128xbf16>
    %cst_20 = arith.constant dense<0.000000e+00> : vector<8x8xf32>
    %53 = tpu.matmul %44, %49, %cst_20 {dimension_numbers = #tpu.dot_dimension_numbers<[1], [1], [0], [0], [0, 0, 1, 0], [], []>} : vector<8x128xbf16>, vector<8x128xbf16>, vector<8x8xf32> -> vector<8x8xf32>
    %cst_21 = arith.constant dense<0xFF800000> : vector<8xf32>
    %54 = vector.multi_reduction <maximumf>, %53, %cst_21 [1] : vector<8x8xf32> to vector<8xf32>
    %55 = vector.shape_cast %54 : vector<8xf32> to vector<8x1xf32>
    %56 = arith.maximumf %45, %55 : vector<8x1xf32>
    %57 = arith.subf %45, %56 : vector<8x1xf32>
    %58 = math.exp %57 : vector<8x1xf32>
    %59 = vector.broadcast %56 : vector<8x1xf32> to vector<8x8xf32>
    %60 = arith.subf %53, %59 : vector<8x8xf32>
    %61 = math.exp %60 : vector<8x8xf32>
    %62 = arith.mulf %58, %46 : vector<8x1xf32>
    %cst_22 = arith.constant dense<0.000000e+00> : vector<8xf32>
    %63 = vector.multi_reduction <add>, %61, %cst_22 [1] : vector<8x8xf32> to vector<8xf32>
    %64 = vector.shape_cast %63 : vector<8xf32> to vector<8x1xf32>
    %65 = arith.addf %62, %64 : vector<8x1xf32>
    %66 = vector.broadcast %58 : vector<8x1xf32> to vector<8x128xf32>
    %67 = arith.mulf %66, %47 : vector<8x128xf32>
    %68 = arith.truncf %61 : vector<8x8xf32> to vector<8x8xbf16>
    %cst_23 = arith.constant dense<0.000000e+00> : vector<8x128xf32>
    %69 = tpu.matmul %68, %52, %cst_23 {dimension_numbers = #tpu.dot_dimension_numbers<[1], [0], [0], [1], [0, 0, 1, 1], [], []>} : vector<8x8xbf16>, vector<8x128xbf16>, vector<8x128xf32> -> vector<8x128xf32>
    %70 = arith.addf %67, %69 : vector<8x128xf32>
    %71 = tpu.reciprocal %65 {approx = true} : vector<8x1xf32> -> vector<8x1xf32>
    %72 = vector.broadcast %71 : vector<8x1xf32> to vector<8x128xf32>
    %73 = arith.mulf %70, %72 : vector<8x128xf32>
    %cst_24 = arith.constant dense<0.000000e+00> : vector<8xf32>
    %74 = vector.multi_reduction <add>, %73, %cst_24 [1] : vector<8x128xf32> to vector<8xf32>
    %75 = vector.shape_cast %74 : vector<8xf32> to vector<8x1xf32>
    %cst_25 = arith.constant 3.125000e-02 : f32
    %76 = vector.broadcast %cst_25 : f32 to vector<8x1xf32>
    %77 = arith.mulf %75, %76 : vector<8x1xf32>
    %78 = arith.mulf %73, %73 : vector<8x128xf32>
    %cst_26 = arith.constant dense<0.000000e+00> : vector<8xf32>
    %79 = vector.multi_reduction <add>, %78, %cst_26 [1] : vector<8x128xf32> to vector<8xf32>
    %80 = vector.shape_cast %79 : vector<8xf32> to vector<8x1xf32>
    %cst_27 = arith.constant 3.125000e-02 : f32
    %81 = vector.broadcast %cst_27 : f32 to vector<8x1xf32>
    %82 = arith.mulf %80, %81 : vector<8x1xf32>
    %83 = arith.mulf %77, %77 : vector<8x1xf32>
    %84 = arith.subf %82, %83 : vector<8x1xf32>
    %85 = vector.broadcast %77 : vector<8x1xf32> to vector<8x128xf32>
    %86 = arith.subf %73, %85 : vector<8x128xf32>
    %cst_28 = arith.constant 9.99999974E-6 : f32
    %87 = vector.broadcast %cst_28 : f32 to vector<8x1xf32>
    %88 = arith.addf %84, %87 : vector<8x1xf32>
    %89 = math.rsqrt %88 : vector<8x1xf32>
    %90 = vector.broadcast %89 : vector<8x1xf32> to vector<8x128xf32>
    %91 = arith.mulf %86, %90 : vector<8x128xf32>
    %92 = vector.broadcast %1 : vector<1x128xf32> to vector<8x128xf32>
    %93 = arith.mulf %91, %92 : vector<8x128xf32>
    %94 = vector.broadcast %2 : vector<1x128xf32> to vector<8x128xf32>
    %95 = arith.addf %93, %94 : vector<8x128xf32>
    %96 = arith.truncf %95 : vector<8x128xf32> to vector<8x128xbf16>
    %c0_29 = arith.constant 0 : index
    %c0_30 = arith.constant 0 : index
    %97 = vector.load %arg3[%c0_29, %c0_30] : memref<128x128xbf16, #tpu.memory_space<vmem>>, vector<128x128xbf16>
    %cst_31 = arith.constant dense<0.000000e+00> : vector<8x128xf32>
    %98 = tpu.matmul %96, %97, %cst_31 {dimension_numbers = #tpu.dot_dimension_numbers<[1], [0], [0], [1], [0, 0, 1, 1], [], []>} : vector<8x128xbf16>, vector<128x128xbf16>, vector<8x128xf32> -> vector<8x128xf32>
    %99 = vector.broadcast %3 : vector<1x128xf32> to vector<8x128xf32>
    %100 = arith.addf %98, %99 : vector<8x128xf32>
    %101 = arith.addf %100, %95 : vector<8x128xf32>
    %c0_32 = arith.constant 0 : index
    %c0_33 = arith.constant 0 : index
    %c0_34 = arith.constant 0 : index
    %102 = vector.load %arg4[%c0_32, %c0_33, %c0_34] : memref<1x8x128xf32, #tpu.memory_space<vmem>>, vector<1x8x128xf32>
    %103 = vector.shape_cast %102 : vector<1x8x128xf32> to vector<8x128xf32>
    %104 = vector.shape_cast %101 : vector<8x128xf32> to vector<1x8x128xf32>
    tpu.vector_store %arg4[%c0_32, %c0_33, %c0_34], %104 {strides = array<i32>} : memref<1x8x128xf32, #tpu.memory_space<vmem>>, vector<1x8x128xf32>,
    return
  }
  func.func @transform_0(%arg0: i32) -> (i32, i32, i32) {
    %c0_i32 = arith.constant 0 : i32
    %c0_i32_0 = arith.constant 0 : i32
    %c0_i32_1 = arith.constant 0 : i32
    return %arg0, %c0_i32, %c0_i32_0 : i32, i32, i32
  }
  func.func @transform_1(%arg0: i32) -> (i32, i32) {
    %c0_i32 = arith.constant 0 : i32
    %c0_i32_0 = arith.constant 0 : i32
    %c0_i32_1 = arith.constant 0 : i32
    return %c0_i32, %c0_i32_0 : i32, i32
  }
  func.func @transform_2(%arg0: i32) -> (i32, i32) {
    %c0_i32 = arith.constant 0 : i32
    %c0_i32_0 = arith.constant 0 : i32
    %c0_i32_1 = arith.constant 0 : i32
    return %c0_i32, %c0_i32_0 : i32, i32
  }
  func.func @transform_3(%arg0: i32) -> (i32, i32, i32) {
    %c0_i32 = arith.constant 0 : i32
    %c0_i32_0 = arith.constant 0 : i32
    %c0_i32_1 = arith.constant 0 : i32
    return %arg0, %c0_i32, %c0_i32_0 : i32, i32, i32
  }
}

</mosaic_0001>

<llo_original>
// kernel: tpu_custom_call.1
$region0: #{tpu_custom_call.1}
  #allocation0 [shape = 'u32[]', space=smem, size = 0x4, offset = 0x4, fixed_abs, tag = 'smem constant byte address 0x4 - core index']
  #allocation1 [shape = 'u32[144,128]{1,0:T(1,128)}', space=vmem, size = 0x12000, scoped, tag = 'internal scratch']
  #allocation2 [shape = 'f32[8,128]{1,0:T(8,128)}', space=vmem, size = 0x1000, scoped, tag = 'scratch operand']
  %s0 = inlined_call_operand.hbm [shape: f32[2,8,128], index: 0, kind: input, shape index: {}]
  %s1 = inlined_call_operand.hbm [shape: f32[4,128], index: 1, kind: input, shape index: {}]
  %s2 = inlined_call_operand.hbm [shape: bf16[128,128], index: 2, kind: input, shape index: {}]
  %s3 = inlined_call_operand.hbm [shape: f32[2,8,128], index: 3, kind: output, shape index: {}]
  %s4 = sld [smem:[#allocation0]]
  $region57: #{tpu_custom_call.1} parent=0
    _
  %s6 = ssub.s32 1, %s4
  %s7 = scalar_select 0, %s6, %s4
  $region1: #{tpu_custom_call.1} parent=0
    #allocation3 [shape = 'u8[8192]{0}', space=vmem, size = 0x2000, scoped, tag = 'input window, operand 0']
    #allocation4 [shape = 's32[2]{0}', space=sflag, size = 0x8, scoped, tag = 'scoped memory for tpu_custom_call.1']
    #allocation5 [shape = 's32[2]{0}', space=sflag, size = 0x8, scoped, tag = 'scoped memory for tpu_custom_call.1']
    #allocation6 [shape = 'u8[2048]{0}', space=vmem, size = 0x800, scoped, tag = 'input window, operand 1, single buffered']
    #allocation7 [shape = 's32[1]{0}', space=sflag, size = 0x4, scoped, tag = 'scoped memory for tpu_custom_call.1']
    #allocation8 [shape = 'u8[32768]{0}', space=vmem, size = 0x8000, scoped, tag = 'input window, operand 2, single buffered']
    #allocation9 [shape = 'u8[8192]{0}', space=vmem, size = 0x2000, scoped, tag = 'output window, operand 0']
    %8 = vsyncpa [#allocation4], 0
    %s9 = scalar_lea.sflag [#allocation4], 1
    %10 = vsyncpa %s9, 0
    %11 = vsyncpa [#allocation7], 0
    %12 = vsyncpa [#allocation5], 0
    %s13 = scalar_lea.sflag [#allocation5], 1
    %14 = vsyncpa %s13, 0
    loop: start=0, step=1, limit=4
    $region2: #{tpu_custom_call.1} parent=1 // loop_pre_header
      _
    $region3: #{tpu_custom_call.1} parent=1 // loop_header
      %s16 = sphi 0, %s20
      %p17 = scmp.ge.s32.totalorder %s16, 4
      %s26 = sphi 0, %s28
      %s29 = sphi 0, %s26
      %s30 = sphi 0, %s29
      %s46 = sphi 0, %s30
      %s50 = sphi 0, %s50
      %s52 = sphi 0, %s50
      %s53 = sphi 0, %s52
      %s67 = sphi 0, %s53
      %s71 = sphi 0, %s71
      %s73 = sphi 0, %s71
      %s74 = sphi 0, %s73
      %s88 = sphi 0, %s74
      %s94 = sphi 0, %s96
      %s97 = sphi 0, %s94
      %s98 = sphi 0, %s97
      %s114 = sphi 0, %s98
    $region4: #{tpu_custom_call.1} parent=1 // loop_header_branch
      %19 = sbr.rel (%p17) target = $region8
    $region5: #{tpu_custom_call.1} parent=1 // loop_body
      %s21 = ssub.s32 %s16, 1
      %s22 = ssub.s32 %s16, 2
      %s23 = sadd.s32 %s16, 1
      %s24 = ssub.s32 %s16, %s23
      %p25 = scmp.eq.s32.totalorder %s24, 0
      %s27 = sadd.s32 %s26, 1
      %s28 = scalar_select %p25, %s26, %s27
      %p31 = pneg %p25
      %p32 = scmp.eq.s32.totalorder %s16, 1
      %p33 = por %p31, %p32
      %p34 = scmp.ne.s32.totalorder %s26, %s29
      %p35 = scmp.eq.s32.totalorder %s16, 0
      %p36 = por %p34, %p35
      %p37 = scmp.ne.s32.totalorder %s26, %s29
      %p38 = scmp.eq.s32.totalorder %s21, 1
      %p39 = por %p37, %p38
      %p40 = scmp.ne.s32.totalorder %s29, %s30
      %p41 = scmp.eq.s32.totalorder %s21, 0
      %p42 = por %p40, %p41
      %p43 = scmp.ne.s32.totalorder %s29, %s30
      %p44 = scmp.eq.s32.totalorder %s22, 1
      %p45 = por %p43, %p44
      %p47 = scmp.ne.s32.totalorder %s30, %s46
      %p48 = scmp.eq.s32.totalorder %s22, 0
      %p49 = por %p47, %p48
      %s51 = sadd.s32 %s50, 1
      %p54 = scmp.eq.s32.totalorder %s16, 1
      %p55 = scmp.ne.s32.totalorder %s50, %s52
      %p56 = scmp.eq.s32.totalorder %s16, 0
      %p57 = por %p55, %p56
      %p58 = scmp.ne.s32.totalorder %s50, %s52
      %p59 = scmp.eq.s32.totalorder %s21, 1
      %p60 = por %p58, %p59
      %p61 = scmp.ne.s32.totalorder %s52, %s53
      %p62 = scmp.eq.s32.totalorder %s21, 0
      %p63 = por %p61, %p62
      %p64 = scmp.ne.s32.totalorder %s52, %s53
      %p65 = scmp.eq.s32.totalorder %s22, 1
      %p66 = por %p64, %p65
      %p68 = scmp.ne.s32.totalorder %s53, %s67
      %p69 = scmp.eq.s32.totalorder %s22, 0
      %p70 = por %p68, %p69
      %s72 = sadd.s32 %s71, 1
      %p75 = scmp.eq.s32.totalorder %s16, 1
      %p76 = scmp.ne.s32.totalorder %s71, %s73
      %p77 = scmp.eq.s32.totalorder %s16, 0
      %p78 = por %p76, %p77
      %p79 = scmp.ne.s32.totalorder %s71, %s73
      %p80 = scmp.eq.s32.totalorder %s21, 1
      %p81 = por %p79, %p80
      %p82 = scmp.ne.s32.totalorder %s73, %s74
      %p83 = scmp.eq.s32.totalorder %s21, 0
      %p84 = por %p82, %p83
      %p85 = scmp.ne.s32.totalorder %s73, %s74
      %p86 = scmp.eq.s32.totalorder %s22, 1
      %p87 = por %p85, %p86
      %p89 = scmp.ne.s32.totalorder %s74, %s88
      %p90 = scmp.eq.s32.totalorder %s22, 0
      %p91 = por %p89, %p90
      %s92 = ssub.s32 %s16, %s23
      %p93 = scmp.eq.s32.totalorder %s92, 0
      %s95 = sadd.s32 %s94, 1
      %s96 = scalar_select %p93, %s94, %s95
      %p99 = pneg %p93
      %p100 = scmp.eq.s32.totalorder %s16, 1
      %p101 = por %p99, %p100
      %p102 = scmp.ne.s32.totalorder %s94, %s97
      %p103 = scmp.eq.s32.totalorder %s16, 0
      %p104 = por %p102, %p103
      %p105 = scmp.ne.s32.totalorder %s94, %s97
      %p106 = scmp.eq.s32.totalorder %s21, 1
      %p107 = por %p105, %p106
      %p108 = scmp.ne.s32.totalorder %s97, %s98
      %p109 = scmp.eq.s32.totalorder %s21, 0
      %p110 = por %p108, %p109
      %p111 = scmp.ne.s32.totalorder %s97, %s98
      %p112 = scmp.eq.s32.totalorder %s22, 1
      %p113 = por %p111, %p112
      %p115 = scmp.ne.s32.totalorder %s98, %s114
      %p116 = scmp.eq.s32.totalorder %s22, 0
      %p117 = por %p115, %p116
      %p118 = scmp.le.s32.totalorder 1, %s16
      %p119 = scmp.lt.s32.totalorder %s16, 3
      %p120 = pnand %p118, %p119
      %p121 = pneg %p120
      // Predicated region
      $region9: #{tpu_custom_call.1} parent=5 // pred_check
        _
      $region10: #{tpu_custom_call.1} parent=5 // pred_check_branch
        %123 = sbr.rel (%p120) target = $region12
      $region11: #{tpu_custom_call.1} parent=5 // pred_region
        %s124 = ssub.s32 %s16, 1
        // Predicated region
        $region13: #{tpu_custom_call.1} parent=11 // pred_check
          %p125 = pneg %p63
        $region14: #{tpu_custom_call.1} parent=11 // pred_check_branch
          %127 = sbr.rel (%p125) target = $region16
        $region15: #{tpu_custom_call.1} parent=11 // pred_region
          %s129 = ssub.s32 64, 64
          %130 = vsyncadd [#allocation7], %s129
          %s132 = sshll.u32 [#allocation6], 4
          %s133 = int_to_ptr.vmem [resolvable:$true] %s132
          %135 = dma.hbm_to_vmem [thread:$0]  %s1, 64, %s133, [#allocation7]
        $region16: #{tpu_custom_call.1} parent=11 // pred_fallthru
          _
        // Predicated region
        $region17: #{tpu_custom_call.1} parent=11 // pred_check
          %p136 = pneg %p84
        $region18: #{tpu_custom_call.1} parent=11 // pred_check_branch
          %138 = sbr.rel (%p136) target = $region20
        $region19: #{tpu_custom_call.1} parent=11 // pred_region
          %s140 = ssub.s32 1024, 1024
          %141 = vsyncadd [#allocation7], %s140
          %s142 = sshll.u32 [#allocation8], 4
          %s143 = int_to_ptr.vmem [resolvable:$true] %s142
          %148 = dma.hbm_to_vmem [thread:$0]  %s2, 1024, %s143, [#allocation7], 64, 64, 4
        $region20: #{tpu_custom_call.1} parent=11 // pred_fallthru
          _
      $region12: #{tpu_custom_call.1} parent=5 // pred_fallthru
        _
      %p149 = scmp.lt.s32.totalorder %s16, 2
      // Predicated region
      $region21: #{tpu_custom_call.1} parent=5 // pred_check
        %p150 = pneg %p149
      $region22: #{tpu_custom_call.1} parent=5 // pred_check_branch
        %152 = sbr.rel (%p150) target = $region24
      $region23: #{tpu_custom_call.1} parent=5 // pred_region
        // Predicated region
        $region25: #{tpu_custom_call.1} parent=23 // pred_check
          %p153 = pneg %p36
        $region26: #{tpu_custom_call.1} parent=23 // pred_check_branch
          %155 = sbr.rel (%p153) target = $region28
        $region27: #{tpu_custom_call.1} parent=23 // pred_region
          %s156 = sand.u32 %s26, 1
          %s157 = scalar_lea.sflag [#allocation4], %s156
          %s158 = sand.u32 %s26, 1
          %s159 = smul.addr %s158, 8
          %s160 = scalar_lea.vmem [#allocation3], %s159
          %s162 = ssub.s32 128, 128
          %163 = vsyncadd %s157, %s162
          %s164 = smul.addr %s16, 128
          %s165 = scalar_lea.hbm %s0, %s164
          %s167 = sshll.u32 %s160, 4
          %s168 = int_to_ptr.vmem [resolvable:$true] %s167
          %170 = dma.hbm_to_vmem [thread:$0]  %s165, 128, %s168, %s157
        $region28: #{tpu_custom_call.1} parent=23 // pred_fallthru
          _
      $region24: #{tpu_custom_call.1} parent=5 // pred_fallthru
        _
      %p171 = scmp.le.s32.totalorder 1, %s16
      %p172 = scmp.lt.s32.totalorder %s16, 3
      %p173 = pnand %p171, %p172
      %p174 = pneg %p173
      // Predicated region
      $region29: #{tpu_custom_call.1} parent=5 // pred_check
        _
      $region30: #{tpu_custom_call.1} parent=5 // pred_check_branch
        %176 = sbr.rel (%p173) target = $region32
      $region31: #{tpu_custom_call.1} parent=5 // pred_region
        %s177 = ssub.s32 %s16, 1
        %s178 = sand.u32 %s29, 1
        %s179 = scalar_lea.sflag [#allocation4], %s178
        %s180 = sand.u32 %s29, 1
        %s181 = smul.addr %s180, 8
        %s182 = scalar_lea.vmem [#allocation3], %s181
        // Predicated region
        $region33: #{tpu_custom_call.1} parent=31 // pred_check
          %p183 = pneg %p42
        $region34: #{tpu_custom_call.1} parent=31 // pred_check_branch
          %185 = sbr.rel (%p183) target = $region36
        $region35: #{tpu_custom_call.1} parent=31 // pred_region
          %186 = dma.done %s179, 128
        $region36: #{tpu_custom_call.1} parent=31 // pred_fallthru
          _
        // Predicated region
        $region37: #{tpu_custom_call.1} parent=31 // pred_check
          %p187 = pneg %p63
        $region38: #{tpu_custom_call.1} parent=31 // pred_check_branch
          %189 = sbr.rel (%p187) target = $region40
        $region39: #{tpu_custom_call.1} parent=31 // pred_region
          %190 = dma.done [#allocation7], 64
        $region40: #{tpu_custom_call.1} parent=31 // pred_fallthru
          _
        // Predicated region
        $region41: #{tpu_custom_call.1} parent=31 // pred_check
          %p191 = pneg %p84
        $region42: #{tpu_custom_call.1} parent=31 // pred_check_branch
          %193 = sbr.rel (%p191) target = $region44
        $region43: #{tpu_custom_call.1} parent=31 // pred_region
          %194 = dma.done [#allocation7], 1024
        $region44: #{tpu_custom_call.1} parent=31 // pred_fallthru
          _
        %s195 = sand.u32 %s29, 1
        %s196 = scalar_lea.sflag [#allocation4], %s195
        %s197 = sand.u32 %s29, 1
        %s198 = smul.addr %s197, 8
        %s199 = scalar_lea.vmem [#allocation3], %s198
        %p200 = pneg %p42
        %p201 = pneg %p39
        %p202 = pneg %p63
        %p203 = pneg %p60
        %p204 = pneg %p84
        %p205 = pneg %p81
        %p206 = pneg %p110
        %p207 = pneg %p107
        %s208 = sand.u32 %s97, 1
        %s209 = scalar_lea.sflag [#allocation5], %s208
        %s210 = sand.u32 %s97, 1
        %s211 = smul.addr %s210, 8
        %s212 = scalar_lea.vmem [#allocation9], %s211
        %v214 = vld [vmem:[#allocation6] sm:$0x1]
        %v215 = vld [vmem:[#allocation6 + $0x1] sm:$0x1]
        %v216 = vld [vmem:[#allocation6 + $0x2] sm:$0x1]
        %v217 = vld [vmem:[#allocation6 + $0x3] sm:$0x1]
        %v218 = vsub.f32 1.0, %v214
        %v219 = vld [vmem:[%s182] sm:$0xff]
        %v220 = vmul.f32 %v214, %v219
        %v221 = vmul.f32 %v218, 0.0
        %v222 = vadd.f32 %v220, %v221
        %v224 = vrot.slane %v219, 1
        %v226 = vmul.f32 %v214, %v224
        %v227 = vmul.f32 %v218, %v222
        %v228 = vadd.f32 %v226, %v227
        %v229 = vrot.slane %v219, 2
        %v231 = vmul.f32 %v214, %v229
        %v232 = vmul.f32 %v218, %v228
        %v233 = vadd.f32 %v231, %v232
        %v234 = vrot.slane %v219, 3
        %v236 = vmul.f32 %v214, %v234
        %v237 = vmul.f32 %v218, %v233
        %v238 = vadd.f32 %v236, %v237
        %v239 = vrot.slane %v219, 4
        %v241 = vmul.f32 %v214, %v239
        %v242 = vmul.f32 %v218, %v238
        %v243 = vadd.f32 %v241, %v242
        %v244 = vrot.slane %v219, 5
        %v246 = vmul.f32 %v214, %v244
        %v247 = vmul.f32 %v218, %v243
        %v248 = vadd.f32 %v246, %v247
        %v249 = vrot.slane %v219, 6
        %v251 = vmul.f32 %v214, %v249
        %v252 = vmul.f32 %v218, %v248
        %v253 = vadd.f32 %v251, %v252
        %v254 = vrot.slane %v219, 7
        %v256 = vmul.f32 %v214, %v254
        %v257 = vmul.f32 %v218, %v253
        %v258 = vadd.f32 %v256, %v257
        %v260 = vrot.slane %v228, 7
        %v263 = vrot.slane %v233, 6
        %v266 = vrot.slane %v238, 5
        %v269 = vrot.slane %v243, 4
        %v272 = vrot.slane %v248, 3
        %v275 = vrot.slane %v253, 2
        %v278 = vrot.slane %v258, 1
        %vm280 = vcmask 1040384
        %v281 = vsel %vm280, %v222, %v260
        %vm282 = vcmask 1041408
        %v283 = vsel %vm282, %v281, %v263
        %vm284 = vcmask 1042432
        %v285 = vsel %vm284, %v283, %v266
        %vm286 = vcmask 1043456
        %v287 = vsel %vm286, %v285, %v269
        %vm288 = vcmask 1044480
        %v289 = vsel %vm288, %v287, %v272
        %vm290 = vcmask 1045504
        %v291 = vsel %vm290, %v289, %v275
        %vm292 = vcmask 1046528
        %v293 = vsel %vm292, %v291, %v278
        %294 = vst [vmem:[#allocation2] sm:$0xff] %v293
        %v295 = vld [vmem:[#allocation2] sm:$0xff]
        %v296 = vpack.c.bf16 %v295, %v295
        %v297 = vld [vmem:[%s182] sm:$0xff]
        %v298 = vpack.c.bf16 %v297, %v297
        %299 = vmatprep.subr.bf16.mxu0 0
        %300 = vmatpush1.bf16.xpose.msra.mxu0 %v296
        %301 = vmatprep.subr.bf16.mxu0 0
        %302 = vmatpush1.bf16.xpose.msra.mxu0 0
        %303 = vmatprep.subr.bf16.mxu0 0
        %304 = vmatpush1.bf16.xpose.msra.mxu0 0
        %305 = vmatprep.subr.bf16.mxu0 0
        %306 = vmatpush1.bf16.xpose.msra.mxu0 0
        %307 = vmatprep.subr.bf16.mxu0 0
        %308 = vmatpush1.bf16.xpose.msra.mxu0 0
        %309 = vmatprep.subr.bf16.mxu0 0
        %310 = vmatpush1.bf16.xpose.msra.mxu0 0
        %311 = vmatprep.subr.bf16.mxu0 0
        %312 = vmatpush1.bf16.xpose.msra.mxu0 0
        %313 = vmatprep.subr.bf16.mxu0 0
        %314 = vmatpush1.bf16.xpose.msra.mxu0 0
        %315 = vmatprep.subr.bf16.mxu0 0
        %316 = vmatpush1.bf16.xpose.msra.mxu0 0
        %317 = vmatprep.subr.bf16.mxu0 0
        %318 = vmatpush1.bf16.xpose.msra.mxu0 0
        %319 = vmatprep.subr.bf16.mxu0 0
        %320 = vmatpush1.bf16.xpose.msra.mxu0 0
        %321 = vmatprep.subr.bf16.mxu0 0
        %322 = vmatpush1.bf16.xpose.msra.mxu0 0
        %323 = vmatprep.subr.bf16.mxu0 0
        %324 = vmatpush1.bf16.xpose.msra.mxu0 0
        %325 = vmatprep.subr.bf16.mxu0 0
        %326 = vmatpush1.bf16.xpose.msra.mxu0 0
        %327 = vmatprep.subr.bf16.mxu0 0
        %328 = vmatpush1.bf16.xpose.msra.mxu0 0
        %329 = vmatprep.subr.bf16.mxu0 0
        %330 = vmatpush1.bf16.xpose.msra.mxu0 0
        %331 = vmatprep.mubr.bf16.mxu0 0
        %332 = vmatmul.mubr.bf16.gmra.mrb[0].mxu0 %v296
        %v333 = vpop.f32.mrb[0].mxu0
        %v334 = vadd.f32 0.0, %v333
        %v335 = vpop.f32.mrb[0].mxu0
        %v336 = vpop.f32.mrb[0].mxu0
        %v337 = vpop.f32.mrb[0].mxu0
        %338 = vdwg.mxu0
        %vm339 = vcmask 64512
        %v340 = vsel %vm339, %v334, -inf
        %341 = vmax.xlane.f32.xlu0 %v340
        %v342 = vpop.xlane.xlu0 %341
        %v343 = vsub.f32 -inf, %v342
        %v344 = vmul.f32 %v343, 1.442695
        %v345 = vpow.pop %v344
        %v346 = vsub.f32 %v334, %v342
        %v347 = vmul.f32 %v346, 1.442695
        %v348 = vpow.pop %v347
        %v349 = vmul.f32 %v345, 0.0
        %v350 = vsel %vm339, %v348, 0.0
        %351 = vadd.xlane.f32.xlu0 %v350
        %v352 = vpop.xlane.xlu0 %351
        %v353 = vadd.f32 %v349, %v352
        %v354 = vpack.c.bf16 %v348, %v348
        %v356 = vsel %vm339, %v354, 0
        %v359 = vsel %vm286, %v298, 0
        %361 = vmatprep.subr.bf16.mxu0 0
        %362 = vmatpush1.bf16.msra.mxu0 %v359
        %363 = vmatprep.subr.bf16.mxu0 0
        %364 = vmatpush1.bf16.msra.mxu0 0
        %365 = vmatprep.subr.bf16.mxu0 0
        %366 = vmatpush1.bf16.msra.mxu0 0
        %367 = vmatprep.subr.bf16.mxu0 0
        %368 = vmatpush1.bf16.msra.mxu0 0
        %369 = vmatprep.subr.bf16.mxu0 0
        %370 = vmatpush1.bf16.msra.mxu0 0
        %371 = vmatprep.subr.bf16.mxu0 0
        %372 = vmatpush1.bf16.msra.mxu0 0
        %373 = vmatprep.subr.bf16.mxu0 0
        %374 = vmatpush1.bf16.msra.mxu0 0
        %375 = vmatprep.subr.bf16.mxu0 0
        %376 = vmatpush1.bf16.msra.mxu0 0
        %377 = vmatprep.subr.bf16.mxu0 0
        %378 = vmatpush1.bf16.msra.mxu0 0
        %379 = vmatprep.subr.bf16.mxu0 0
        %380 = vmatpush1.bf16.msra.mxu0 0
        %381 = vmatprep.subr.bf16.mxu0 0
        %382 = vmatpush1.bf16.msra.mxu0 0
        %383 = vmatprep.subr.bf16.mxu0 0
        %384 = vmatpush1.bf16.msra.mxu0 0
        %385 = vmatprep.subr.bf16.mxu0 0
        %386 = vmatpush1.bf16.msra.mxu0 0
        %387 = vmatprep.subr.bf16.mxu0 0
        %388 = vmatpush1.bf16.msra.mxu0 0
        %389 = vmatprep.subr.bf16.mxu0 0
        %390 = vmatpush1.bf16.msra.mxu0 0
        %391 = vmatprep.subr.bf16.mxu0 0
        %392 = vmatpush1.bf16.msra.mxu0 0
        %393 = vmatprep.mubr.bf16.mxu0 0
        %394 = vmatmul.mubr.bf16.gmra.mrb[0].mxu0 %v356
        %v395 = vpop.f32.mrb[0].mxu0
        %v396 = vadd.f32 0.0, %v395
        %v397 = vpop.f32.mrb[0].mxu0
        %v398 = vpop.f32.mrb[0].mxu0
        %v399 = vpop.f32.mrb[0].mxu0
        %400 = vdwg.mxu0
        %v401 = vadd.f32 %v349, %v396
        %v402 = vrcp.pop %v353
        %v403 = vmul.f32 %v401, %v402
        %404 = vadd.xlane.f32.xlu0 %v403
        %v405 = vpop.xlane.xlu0 %404
        %v406 = vmul.f32 %v405, 0.03125
        %v407 = vmul.f32 %v403, %v403
        %408 = vadd.xlane.f32.xlu0 %v407
        %v409 = vpop.xlane.xlu0 %408
        %v410 = vmul.f32 %v409, 0.03125
        %v411 = vmul.f32 %v406, %v406
        %v412 = vsub.f32 %v410, %v411
        %v413 = vsub.f32 %v403, %v406
        %v414 = vadd.f32 %v412, 1e-05
        %v415 = vrsqrt.pop %v414
        %v416 = vmul.f32 %v413, %v415
        %v417 = vlaneseq
        %v418 = vshrl.u32 %v417, 7
        %v419 = vsub.s32 0, %v418
        %v420 = vrot.slane %v215, %v419
        %v421 = vmul.f32 %v416, %v420
        %v422 = vlaneseq
        %v423 = vshrl.u32 %v422, 7
        %v424 = vsub.s32 0, %v423
        %v425 = vrot.slane %v216, %v424
        %v426 = vadd.f32 %v421, %v425
        %v427 = vpack.c.bf16 %v426, %v426
        %v428 = vld [vmem:[#allocation8] sm:$0xf]
        %v429 = vld [vmem:[#allocation8 + $0x4] sm:$0xf]
        %v430 = vld [vmem:[#allocation8 + $0x8] sm:$0xf]
        %v431 = vld [vmem:[#allocation8 + $0xc] sm:$0xf]
        %v432 = vld [vmem:[#allocation8 + $0x10] sm:$0xf]
        %v433 = vld [vmem:[#allocation8 + $0x14] sm:$0xf]
        %v434 = vld [vmem:[#allocation8 + $0x18] sm:$0xf]
        %v435 = vld [vmem:[#allocation8 + $0x1c] sm:$0xf]
        %v436 = vld [vmem:[#allocation8 + $0x20] sm:$0xf]
        %v437 = vld [vmem:[#allocation8 + $0x24] sm:$0xf]
        %v438 = vld [vmem:[#allocation8 + $0x28] sm:$0xf]
        %v439 = vld [vmem:[#allocation8 + $0x2c] sm:$0xf]
        %v440 = vld [vmem:[#allocation8 + $0x30] sm:$0xf]
        %v441 = vld [vmem:[#allocation8 + $0x34] sm:$0xf]
        %v442 = vld [vmem:[#allocation8 + $0x38] sm:$0xf]
        %v443 = vld [vmem:[#allocation8 + $0x3c] sm:$0xf]
        %v444 = vlaneseq
        %v445 = vshrl.u32 %v444, 7
        %v446 = vsub.s32 0, %v445
        %v447 = vrot.slane %v217, %v446
        %v464 = vunpack.c.l.b16 %v428
        %v465 = vunpack.c.l.b16 %v429
        %v466 = vunpack.c.l.b16 %v430
        %v467 = vunpack.c.l.b16 %v431
        %v468 = vunpack.c.l.b16 %v432
        %v469 = vunpack.c.l.b16 %v433
        %v470 = vunpack.c.l.b16 %v434
        %v471 = vunpack.c.l.b16 %v435
        %v472 = vunpack.c.l.b16 %v436
        %v473 = vunpack.c.l.b16 %v437
        %v474 = vunpack.c.l.b16 %v438
        %v475 = vunpack.c.l.b16 %v439
        %v476 = vunpack.c.l.b16 %v440
        %v477 = vunpack.c.l.b16 %v441
        %v478 = vunpack.c.l.b16 %v442
        %v479 = vunpack.c.l.b16 %v443
        %v480 = vpack.c.b16 %v465, %v464
        %v481 = vpack.c.b16 %v467, %v466
        %v482 = vpack.c.b16 %v469, %v468
        %v483 = vpack.c.b16 %v471, %v470
        %v484 = vpack.c.b16 %v473, %v472
        %v485 = vpack.c.b16 %v475, %v474
        %v486 = vpack.c.b16 %v477, %v476
        %v487 = vpack.c.b16 %v479, %v478
        %496 = vmatprep.subr.bf16.mxu0 0
        %497 = vmatpush1.bf16.msra.mxu0 %v480
        %498 = vmatprep.subr.bf16.mxu0 0
        %499 = vmatpush1.bf16.msra.mxu0 %v481
        %500 = vmatprep.subr.bf16.mxu0 0
        %501 = vmatpush1.bf16.msra.mxu0 %v482
        %502 = vmatprep.subr.bf16.mxu0 0
        %503 = vmatpush1.bf16.msra.mxu0 %v483
        %504 = vmatprep.subr.bf16.mxu0 0
        %505 = vmatpush1.bf16.msra.mxu0 %v484
        %506 = vmatprep.subr.bf16.mxu0 0
        %507 = vmatpush1.bf16.msra.mxu0 %v485
        %508 = vmatprep.subr.bf16.mxu0 0
        %509 = vmatpush1.bf16.msra.mxu0 %v486
        %510 = vmatprep.subr.bf16.mxu0 0
        %511 = vmatpush1.bf16.msra.mxu0 %v487
        %512 = vmatprep.subr.bf16.mxu0 0
        %513 = vmatpush1.bf16.msra.mxu0 0
        %514 = vmatprep.subr.bf16.mxu0 0
        %515 = vmatpush1.bf16.msra.mxu0 0
        %516 = vmatprep.subr.bf16.mxu0 0
        %517 = vmatpush1.bf16.msra.mxu0 0
        %518 = vmatprep.subr.bf16.mxu0 0
        %519 = vmatpush1.bf16.msra.mxu0 0
        %520 = vmatprep.subr.bf16.mxu0 0
        %521 = vmatpush1.bf16.msra.mxu0 0
        %522 = vmatprep.subr.bf16.mxu0 0
        %523 = vmatpush1.bf16.msra.mxu0 0
        %524 = vmatprep.subr.bf16.mxu0 0
        %525 = vmatpush1.bf16.msra.mxu0 0
        %526 = vmatprep.subr.bf16.mxu0 0
        %527 = vmatpush1.bf16.msra.mxu0 0
        %528 = vmatprep.mubr.bf16.mxu0 0
        %529 = vmatmul.mubr.bf16.gmra.mrb[0].mxu0 %v427
        %v530 = vpop.f32.mrb[0].mxu0
        %v531 = vadd.f32 %v447, %v530
        %v532 = vpop.f32.mrb[0].mxu0
        %v533 = vpop.f32.mrb[0].mxu0
        %v534 = vpop.f32.mrb[0].mxu0
        %535 = vdwg.mxu0
        %v536 = vadd.f32 %v531, %v426
        %537 = vst [vmem:[%s212] sm:$0xff] %v536
        %s538 = sand.u32 %s97, 1
        %s539 = scalar_lea.sflag [#allocation5], %s538
        %s540 = sand.u32 %s97, 1
        %s541 = smul.addr %s540, 8
        %s542 = scalar_lea.vmem [#allocation9], %s541
        // Predicated region
        $region45: #{tpu_custom_call.1} parent=31 // pred_check
          %p543 = pneg %p107
        $region46: #{tpu_custom_call.1} parent=31 // pred_check_branch
          %545 = sbr.rel (%p543) target = $region48
        $region47: #{tpu_custom_call.1} parent=31 // pred_region
          %s547 = ssub.s32 128, 128
          %548 = vsyncadd %s539, %s547
          %s549 = smul.addr %s21, 128
          %s550 = scalar_lea.hbm %s3, %s549
          %s552 = sshll.u32 %s542, 4
          %s553 = int_to_ptr.vmem [resolvable:$true] %s552
          %555 = dma.vmem_to_hbm [thread:$0]  %s553, 128, %s550, %s539
        $region48: #{tpu_custom_call.1} parent=31 // pred_fallthru
          _
      $region32: #{tpu_custom_call.1} parent=5 // pred_fallthru
        _
      %p556 = scmp.le.s32.totalorder 2, %s16
      // Predicated region
      $region49: #{tpu_custom_call.1} parent=5 // pred_check
        %p557 = pneg %p556
      $region50: #{tpu_custom_call.1} parent=5 // pred_check_branch
        %559 = sbr.rel (%p557) target = $region52
      $region51: #{tpu_custom_call.1} parent=5 // pred_region
        %s560 = ssub.s32 %s16, 2
        // Predicated region
        $region53: #{tpu_custom_call.1} parent=51 // pred_check
          %p561 = pneg %p113
        $region54: #{tpu_custom_call.1} parent=51 // pred_check_branch
          %563 = sbr.rel (%p561) target = $region56
        $region55: #{tpu_custom_call.1} parent=51 // pred_region
          %s564 = sand.u32 %s98, 1
          %s565 = scalar_lea.sflag [#allocation5], %s564
          %s566 = sand.u32 %s98, 1
          %s567 = smul.addr %s566, 8
          %s568 = scalar_lea.vmem [#allocation9], %s567
          %569 = dma.done %s565, 128
        $region56: #{tpu_custom_call.1} parent=51 // pred_fallthru
          _
      $region52: #{tpu_custom_call.1} parent=5 // pred_fallthru
        _
    $region6: #{tpu_custom_call.1} parent=1 // loop_footer
      %s20 = sadd.s32 1, %s16
    $region7: #{tpu_custom_call.1} parent=1 // loop_footer_branch
      %15 = sbr.rel target = $region3
    $region8: #{tpu_custom_call.1} parent=1 // loop_exit
      _
    %570 = vsyncpa [#allocation4], 1
    %s571 = scalar_lea.sflag [#allocation4], 1
    %572 = vsyncpa %s571, 1
    %573 = vsyncpa [#allocation7], 1
    %574 = vsyncpa [#allocation5], 1
    %s575 = scalar_lea.sflag [#allocation5], 1
    %576 = vsyncpa %s575, 1

</llo_original>
